<compile_context>
chip_gen: v5e
topology: v5e:2x2
jax: 0.10.0
libtpu: 0.0.40
codegen_flags: <defaults>
</compile_context>

<pallas_src>
import functools
import math

import jax
import jax.numpy as jnp
from jax.experimental import pallas as pl
from jax.experimental.pallas import tpu as pltpu

EPS = 1e-5


# ---------------------------------------------------------------------------
# Helpers
# ---------------------------------------------------------------------------
def _round_up(v, m):
    return (v + m - 1) // m * m


def _pad2(a, rows, cols, dtype):
    a = a.astype(dtype)
    r, c = a.shape
    if (r, c) == (rows, cols):
        return a
    return jnp.pad(a, ((0, rows - r), (0, cols - c)))


def _pick_tk(kp, cap=1536):
    """kp is a multiple of 128.  Use full K when it fits, else the largest
    128-multiple divisor <= cap (keeps K blocks exact, no K revisit waste)."""
    if kp <= 2048:
        return kp
    for mult in range(cap // 128, 0, -1):
        t = 128 * mult
        if kp % t == 0:
            return t
    return 128


# ---------------------------------------------------------------------------
# Pallas kernels
# ---------------------------------------------------------------------------
def _matmul_affine_kernel(x_ref, w_ref, s_ref, b_ref, o_ref, acc_ref, *, relu):
    """out = maybe_relu((x @ w) * scale + shift); bf16 MXU, f32 accumulate."""
    @pl.when(pl.program_id(2) == 0)
    def _():
        acc_ref[...] = jnp.zeros_like(acc_ref)

    acc_ref[...] += jnp.dot(x_ref[...], w_ref[...],
                            preferred_element_type=jnp.float32)

    @pl.when(pl.program_id(2) == pl.num_programs(2) - 1)
    def _():
        y = acc_ref[...] * s_ref[...] + b_ref[...]
        if relu:
            y = jnp.maximum(y, 0.0)
        o_ref[...] = y.astype(o_ref.dtype)


def _matmul_affine_res_kernel(x_ref, w_ref, s_ref, b_ref, r_ref, o_ref, acc_ref,
                              *, relu):
    """Same as above, but fuses a residual add before the ReLU (ResBlock tail)."""
    @pl.when(pl.program_id(2) == 0)
    def _():
        acc_ref[...] = jnp.zeros_like(acc_ref)

    acc_ref[...] += jnp.dot(x_ref[...], w_ref[...],
                            preferred_element_type=jnp.float32)

    @pl.when(pl.program_id(2) == pl.num_programs(2) - 1)
    def _():
        y = acc_ref[...] * s_ref[...] + b_ref[...] + r_ref[...]
        if relu:
            y = jnp.maximum(y, 0.0)
        o_ref[...] = y.astype(o_ref.dtype)


def _hpool_kernel(x_ref, o_ref):
    # x: (1, Hp, 2, 2*Wp*C) -> max over the H-pair axis.
    x = x_ref[...].astype(jnp.float32)
    o_ref[...] = jnp.max(x, axis=2).astype(o_ref.dtype)


def _wpool_kernel(x_ref, o_ref):
    # x: (1, Hp*Wp, 2*C) -> max of the two adjacent-W channel groups.
    c = o_ref.shape[-1]
    x = x_ref[...].astype(jnp.float32)
    o_ref[...] = jnp.maximum(x[..., :c], x[..., c:]).astype(o_ref.dtype)


def _gru_dir_kernel(gx_ref, whh_ref, bhh_ref, o_ref, h_ref, *, hidden):
    """One GRU direction.  Grid iterates over time ('arbitrary'); the hidden
    state lives in a VMEM scratch and W_hh stays resident (constant index)."""
    @pl.when(pl.program_id(0) == 0)
    def _():
        h_ref[...] = jnp.zeros_like(h_ref)

    h = h_ref[...]                                            # (Bp, H) f32
    gh = jnp.dot(h.astype(jnp.bfloat16), whh_ref[...],
                 preferred_element_type=jnp.float32) + bhh_ref[...]
    gx = gx_ref[0]                                            # (Bp, 3H) f32
    H = hidden
    r = jax.nn.sigmoid(gx[:, :H] + gh[:, :H])
    z = jax.nn.sigmoid(gx[:, H:2 * H] + gh[:, H:2 * H])
    n = jnp.tanh(gx[:, 2 * H:] + r * gh[:, 2 * H:])
    h_new = (1.0 - z) * n + z * h
    h_ref[...] = h_new
    o_ref[0] = h_new


def _softmax_time_sum_kernel(x_ref, o_ref):
    x = x_ref[...]                                   # (B, T, C)
    m = jnp.max(x, axis=-1, keepdims=True)
    e = jnp.exp(x - m)
    sm = e / jnp.sum(e, axis=-1, keepdims=True)
    o_ref[...] = jnp.sum(sm, axis=1)                 # sum over time


# ---------------------------------------------------------------------------
# Pallas wrappers
# ---------------------------------------------------------------------------
def matmul_affine(x, w, scale, shift, relu=False, residual=None,
                  out_dtype=jnp.float32, max_tm=256, max_tn=256):
    """maybe_relu((x @ w) * scale + shift [+ residual]).  bf16 MXU, f32 acc."""
    M, K = x.shape
    K2, N = w.shape
    assert K == K2
    Np = _round_up(N, 128)
    Kp = _round_up(K, 128)
    if M <= max_tm:
        tm = _round_up(M, 16)
        Mp = tm
    else:
        tm = max_tm
        Mp = _round_up(M, tm)
    tn = min(max_tn, Np)
    # If M collapses to a single block, split N so dual-TC chips (v7x) still
    # get >= 2 parallel blocks.
    if Mp == tm and Np >= 256:
        tn = 128
    tk = _pick_tk(Kp)

    xp = _pad2(x, Mp, Kp, jnp.bfloat16)
    wp = _pad2(w, Kp, Np, jnp.bfloat16)
    sp = _pad2(scale.reshape(1, N), 1, Np, jnp.float32)
    bp = _pad2(shift.reshape(1, N), 1, Np, jnp.float32)

    in_specs = [
        pl.BlockSpec((tm, tk), lambda i, j, k: (i, k)),
        pl.BlockSpec((tk, tn), lambda i, j, k: (k, j)),
        pl.BlockSpec((1, tn), lambda i, j, k: (0, j)),
        pl.BlockSpec((1, tn), lambda i, j, k: (0, j)),
    ]
    args = [xp, wp, sp, bp]
    if residual is not None:
        args.append(_pad2(residual, Mp, Np, jnp.float32))
        in_specs.append(pl.BlockSpec((tm, tn), lambda i, j, k: (i, j)))
        kernel = functools.partial(_matmul_affine_res_kernel, relu=relu)
    else:
        kernel = functools.partial(_matmul_affine_kernel, relu=relu)

    out = pl.pallas_call(
        kernel,
        out_shape=jax.ShapeDtypeStruct((Mp, Np), out_dtype),
        grid_spec=pltpu.PrefetchScalarGridSpec(
            num_scalar_prefetch=0,
            grid=(Mp // tm, Np // tn, Kp // tk),
            in_specs=in_specs,
            out_specs=pl.BlockSpec((tm, tn), lambda i, j, k: (i, j)),
            scratch_shapes=[pltpu.VMEM((tm, tn), jnp.float32)],
        ),
        compiler_params=pltpu.CompilerParams(
            dimension_semantics=("parallel", "parallel", "arbitrary")),
    )(*args)
    return out[:M, :N]


def maxpool_2x2(y, Hp, Wp):
    """MaxPool over 2x2 spatial windows, stride 2.  y: (NT, Ho, Wo, C).
    Reads y exactly once (H-pair max, then W-pair max on contiguous reshapes)."""
    NT, Ho, Wo, C = y.shape
    y = y[:, :2 * Hp, :2 * Wp, :]
    row = 2 * Wp * C
    yh_in = y.reshape(NT, Hp, 2, row)
    yh = pl.pallas_call(
        _hpool_kernel,
        out_shape=jax.ShapeDtypeStruct((NT, Hp, row), y.dtype),
        grid_spec=pltpu.PrefetchScalarGridSpec(
            num_scalar_prefetch=0, grid=(NT,),
            in_specs=[pl.BlockSpec((1, Hp, 2, row), lambda n: (n, 0, 0, 0))],
            out_specs=pl.BlockSpec((1, Hp, row), lambda n: (n, 0, 0))),
        compiler_params=pltpu.CompilerParams(dimension_semantics=("parallel",)),
    )(yh_in)
    yw_in = yh.reshape(NT, Hp * Wp, 2 * C)
    out = pl.pallas_call(
        _wpool_kernel,
        out_shape=jax.ShapeDtypeStruct((NT, Hp * Wp, C), y.dtype),
        grid_spec=pltpu.PrefetchScalarGridSpec(
            num_scalar_prefetch=0, grid=(NT,),
            in_specs=[pl.BlockSpec((1, Hp * Wp, 2 * C), lambda n: (n, 0, 0))],
            out_specs=pl.BlockSpec((1, Hp * Wp, C), lambda n: (n, 0, 0))),
        compiler_params=pltpu.CompilerParams(dimension_semantics=("parallel",)),
    )(yw_in)
    return out.reshape(NT, Hp, Wp, C)


def gru_direction(gx, whh_t, bhh, reverse):
    """gx: (T, Bp, 3H) f32 (already includes b_ih).  Returns (T, Bp, H)."""
    T, Bp, H3 = gx.shape
    H = H3 // 3
    if reverse:
        idx = lambda t: (T - 1 - t, 0, 0)
    else:
        idx = lambda t: (t, 0, 0)
    return pl.pallas_call(
        functools.partial(_gru_dir_kernel, hidden=H),
        out_shape=jax.ShapeDtypeStruct((T, Bp, H), jnp.float32),
        grid_spec=pltpu.PrefetchScalarGridSpec(
            num_scalar_prefetch=0,
            grid=(T,),
            in_specs=[
                pl.BlockSpec((1, Bp, H3), idx),
                pl.BlockSpec((H, H3), lambda t: (0, 0)),
                pl.BlockSpec((1, H3), lambda t: (0, 0)),
            ],
            out_specs=pl.BlockSpec((1, Bp, H), idx),
            scratch_shapes=[pltpu.VMEM((Bp, H), jnp.float32)],
        ),
        compiler_params=pltpu.CompilerParams(
            dimension_semantics=("arbitrary",)),
    )(gx, whh_t, bhh)


def softmax_time_sum(x):
    B, T, C = x.shape
    return pl.pallas_call(
        _softmax_time_sum_kernel,
        out_shape=jax.ShapeDtypeStruct((B, C), jnp.float32),
    )(x)


# ---------------------------------------------------------------------------
# Glue: im2col, BN folding, blocks
# ---------------------------------------------------------------------------
def im2col_2d(x, kh, kw, stride, pad):
    N, H, W, C = x.shape
    xp = jnp.pad(x, ((0, 0), (pad, pad), (pad, pad), (0, 0)))
    Ho = (H + 2 * pad - kh) // stride + 1
    Wo = (W + 2 * pad - kw) // stride + 1
    cols = []
    for i in range(kh):
        for j in range(kw):
            cols.append(xp[:, i:i + stride * Ho:stride, j:j + stride * Wo:stride, :])
    col = jnp.stack(cols, axis=-2)                   # (N, Ho, Wo, kh*kw, C)
    return col.reshape(N * Ho * Wo, kh * kw * C), Ho, Wo


def im2col_3d(x, kernel, stride, pad):
    kt, kh, kw = kernel
    st, sh, sw = stride
    pt, ph, pw = pad
    N, T, H, W, C = x.shape
    xp = jnp.pad(x, ((0, 0), (pt, pt), (ph, ph), (pw, pw), (0, 0)))
    To = (T + 2 * pt - kt) // st + 1
    Ho = (H + 2 * ph - kh) // sh + 1
    Wo = (W + 2 * pw - kw) // sw + 1
    cols = []
    for a in range(kt):
        for i in range(kh):
            for j in range(kw):
                cols.append(xp[:, a:a + st * To:st,
                               i:i + sh * Ho:sh,
                               j:j + sw * Wo:sw, :])
    col = jnp.stack(cols, axis=-2)                   # (N, To, Ho, Wo, kt*kh*kw, C)
    return col.reshape(N * To * Ho * Wo, kt * kh * kw * C), To, Ho, Wo


def bn_fold(bn, conv_bias=None):
    gamma, beta, mean, var = bn
    a = gamma / jnp.sqrt(var + EPS)
    if conv_bias is None:
        b = beta - mean * a
    else:
        b = (conv_bias - mean) * a + beta
    return a, b


def conv2d_bn(x, w, bn, stride, pad, relu, residual=None,
              out_dtype=jnp.bfloat16):
    # TODO(synk): im2col still materializes the 3x3 taps (in bf16); an implicit
    # GEMM over the 9 taps would cut activation HBM reads further.
    N, H, W, Cin = x.shape
    Cout, _, kh, kw = w.shape
    col, Ho, Wo = im2col_2d(x.astype(jnp.bfloat16), kh, kw, stride, pad)
    wmat = jnp.transpose(w, (2, 3, 1, 0)).reshape(kh * kw * Cin, Cout)
    scale, shift = bn_fold(bn)
    y = matmul_affine(col, wmat, scale, shift, relu=relu,
                      residual=residual, out_dtype=out_dtype)
    return y.reshape(N, Ho, Wo, Cout)


def resblock_forward(x, p):
    s = p['stride']
    h = conv2d_bn(x, p['w1'], p['bn1'], s, 1, relu=True)
    if p['has_shortcut']:
        sc = conv2d_bn(x, p['ws'], p['bns'], s, 0, relu=False,
                       out_dtype=jnp.float32)
    else:
        sc = x
    Cout = p['w2'].shape[0]
    res = sc.reshape(-1, Cout)
    # Residual add + final ReLU fused into the second conv's matmul epilogue.
    return conv2d_bn(h, p['w2'], p['bn2'], 1, 1, relu=True, residual=res)


def run_gru(seq, gp_f, gp_b):
    """seq: (T, B, hidden) f32 -> (T, B, 2*hidden) f32 (bidirectional GRU)."""
    T, B, Hin = seq.shape
    Bp = _round_up(max(B, 8), 8)
    outs = []
    for gp, rev in ((gp_f, False), (gp_b, True)):
        H = gp['w_hh'].shape[1]
        ones3 = jnp.ones((3 * H,), jnp.float32)
        gx = matmul_affine(seq.reshape(T * B, Hin), gp['w_ih'].T, ones3,
                           gp['b_ih'])
        gx = gx.reshape(T, B, 3 * H)
        gx = jnp.pad(gx, ((0, 0), (0, Bp - B), (0, 0)))
        whh_t = gp['w_hh'].T.astype(jnp.bfloat16)          # (H, 3H)
        bhh = gp['b_hh'].reshape(1, 3 * H).astype(jnp.float32)
        outs.append(gru_direction(gx, whh_t, bhh, rev)[:, :B, :])
    return jnp.concatenate(outs, axis=-1)                  # (T, B, 2H)


# ---------------------------------------------------------------------------
# Parameter initialization (deterministic, synthetic)
# ---------------------------------------------------------------------------
def init_bn(key, c):
    k1, k2, k3, k4 = jax.random.split(key, 4)
    gamma = 1.0 + 0.1 * jax.random.normal(k1, (c,), jnp.float32)
    beta = 0.1 * jax.random.normal(k2, (c,), jnp.float32)
    mean = 0.1 * jax.random.normal(k3, (c,), jnp.float32)
    var = jax.random.uniform(k4, (c,), jnp.float32, 0.5, 1.5)
    return (gamma, beta, mean, var)


def init_conv(key, cout, cin, *ks):
    fan_in = cin * math.prod(ks)
    return jax.random.normal(key, (cout, cin) + tuple(ks), jnp.float32) / math.sqrt(fan_in)


def init_resblock(key, cin, cout, stride):
    ks = jax.random.split(key, 6)
    p = {
        'w1': init_conv(ks[0], cout, cin, 3, 3),
        'bn1': init_bn(ks[1], cout),
        'w2': init_conv(ks[2], cout, cout, 3, 3),
        'bn2': init_bn(ks[3], cout),
        'stride': stride,
        'has_shortcut': (stride != 1 or cin != cout),
    }
    if p['has_shortcut']:
        p['ws'] = init_conv(ks[4], cout, cin, 1, 1)
        p['bns'] = init_bn(ks[5], cout)
    return p


def init_params(key, c_in, num_class, hidden=256):
    keys = iter(jax.random.split(key, 32))
    p = {}
    p['conv3d1_w'] = init_conv(next(keys), 64, c_in, 3, 5, 5)
    p['conv3d1_b'] = 0.1 * jax.random.normal(next(keys), (64,), jnp.float32)
    p['bn1'] = init_bn(next(keys), 64)
    blocks_cfg = [(64, 64, 1),
                  (64, 128, 2), (128, 128, 1),
                  (128, 256, 2), (256, 256, 1),
                  (256, 512, 2), (512, 512, 1)]
    p['blocks'] = [init_resblock(next(keys), ci, co, s) for ci, co, s in blocks_cfg]
    res_channel = 512
    p['res_linear_w'] = jax.random.normal(next(keys), (hidden, res_channel),
                                          jnp.float32) / math.sqrt(res_channel)
    p['res_linear_b'] = 0.1 * jax.random.normal(next(keys), (hidden,), jnp.float32)

    def gru_dir(k):
        k1, k2, k3, k4 = jax.random.split(k, 4)
        sc = 1.0 / math.sqrt(hidden)
        return {
            'w_ih': sc * jax.random.normal(k1, (3 * hidden, hidden), jnp.float32),
            'w_hh': sc * jax.random.normal(k2, (3 * hidden, hidden), jnp.float32),
            'b_ih': sc * jax.random.normal(k3, (3 * hidden,), jnp.float32),
            'b_hh': sc * jax.random.normal(k4, (3 * hidden,), jnp.float32),
        }

    p['gru_fwd'] = gru_dir(next(keys))
    p['gru_bwd'] = gru_dir(next(keys))
    p['cls_w'] = jax.random.normal(next(keys), (num_class, 2 * hidden),
                                   jnp.float32) / math.sqrt(2 * hidden)
    p['cls_b'] = 0.1 * jax.random.normal(next(keys), (num_class,), jnp.float32)
    return p


# ---------------------------------------------------------------------------
# Full forward pass
# ---------------------------------------------------------------------------
def resnet_forward(p, inputs):
    # inputs: (bsz, channel, time, H, W)  -> channels-last bf16 internally
    x = jnp.transpose(inputs, (0, 2, 3, 4, 1)).astype(jnp.bfloat16)  # (N,T,H,W,C)
    N, T, H, W, Cin = x.shape
    hidden = p['res_linear_w'].shape[0]
    nclass = p['cls_w'].shape[0]

    # conv3d1 + bn1 + relu  (bf16 MXU matmul with fused BN/ReLU epilogue)
    col, To, Ho, Wo = im2col_3d(x, (3, 5, 5), (1, 2, 2), (1, 2, 2))
    wmat = jnp.transpose(p['conv3d1_w'], (2, 3, 4, 1, 0)).reshape(-1, 64)
    scale, shift = bn_fold(p['bn1'], p['conv3d1_b'])
    y = matmul_affine(col, wmat, scale, shift, relu=True,
                      out_dtype=jnp.bfloat16)
    y = y.reshape(N * To, Ho, Wo, 64)

    # pool3d1: MaxPool3d((1,2,2), stride (1,2,2)) — single-read Pallas pooling.
    Hp, Wp = (Ho - 2) // 2 + 1, (Wo - 2) // 2 + 1
    feat = maxpool_2x2(y, Hp, Wp)                    # (N*To, Hp, Wp, 64)

    # ResNet body; residual add + ReLU fused into each block's second conv.
    for bp in p['blocks']:
        feat = resblock_forward(feat, bp)
    # TODO(synk): Dropout(p=0.5) after each ResLayer / after res_linear is identity (eval mode).

    # AvgPool2d(kernel=4, stride=1) on 4x4 maps -> (N*T, 512)
    feat = jnp.mean(feat.astype(jnp.float32), axis=(1, 2))

    # res_linear
    feat = matmul_affine(feat, p['res_linear_w'].T,
                         jnp.ones((hidden,), jnp.float32), p['res_linear_b'])
    seq = feat.reshape(N, To, hidden).transpose(1, 0, 2)          # (T, B, hidden)

    # bidirectional GRU: one fused Pallas recurrence kernel per direction
    gru_out = run_gru(seq, p['gru_fwd'], p['gru_bwd'])            # (T, B, 2H)
    gru_out = gru_out.transpose(1, 0, 2)                          # (B, T, 2H)

    # classification linear
    logits = matmul_affine(gru_out.reshape(N * To, 2 * hidden), p['cls_w'].T,
                           jnp.ones((nclass,), jnp.float32), p['cls_b'])
    logits = logits.reshape(N, To, nclass)

    # softmax over classes, sum over time (Pallas kernel)
    return softmax_time_sum(logits)                               # (N, num_class)


# ---------------------------------------------------------------------------
if __name__ == "__main__":
    key = jax.random.PRNGKey(0)
    c_in, num_class = 1, 10
    # H=W=100 is the smallest-ish spatial size for which the module's
    # view(bsz*d, 512) after AvgPool2d(4) is valid (4x4 maps after the ResNet).
    bsz, T, H, W = 2, 2, 100, 100

    kp, kx = jax.random.split(key)
    params = init_params(kp, c_in, num_class)
    x = jax.random.normal(kx, (bsz, c_in, T, H, W), jnp.float32)

    out = resnet_forward(params, x)
    out = jax.block_until_ready(out)
    assert out.shape == (bsz, num_class)
    assert bool(jnp.all(jnp.isfinite(out)))
    print("KERNEL_OK")
</pallas_src>

<mosaic_0001>
module attributes {stable_mosaic.version = 11 : i64} {
  func.func @_matmul_affine_kernel(%arg0: i32, %arg1: i32, %arg2: i32, %arg3: memref<256x128xbf16, #tpu.memory_space<vmem>>, %arg4: memref<128x128xbf16, #tpu.memory_space<vmem>>, %arg5: memref<1x128xf32, #tpu.memory_space<vmem>>, %arg6: memref<1x128xf32, #tpu.memory_space<vmem>>, %arg7: memref<256x128xbf16, #tpu.memory_space<vmem>>, %arg8: memref<256x128xf32, #tpu.memory_space<vmem>>) attributes {dimension_semantics = [#tpu.dimension_semantics<parallel>, #tpu.dimension_semantics<parallel>, #tpu.dimension_semantics<arbitrary>], iteration_bounds = array<i64: 40, 1, 1>, scalar_prefetch = 0 : i64, scratch_operands = 1 : i64, tpu.core_type = #tpu.core_type<tc>, window_params = [{transform_indices = @transform_0, window_bounds = array<i64: 256, 128>}, {transform_indices = @transform_1, window_bounds = array<i64: 128, 128>}, {transform_indices = @transform_2, window_bounds = array<i64: 1, 128>}, {transform_indices = @transform_3, window_bounds = array<i64: 1, 128>}, {transform_indices = @transform_4, window_bounds = array<i64: 256, 128>}]} {
    %c0_i32 = arith.constant 0 : i32
    %0 = arith.cmpi eq, %arg2, %c0_i32 : i32
    %1 = arith.extui %0 : i1 to i32
    %c0_i32_0 = arith.constant 0 : i32
    %2 = arith.cmpi ne, %1, %c0_i32_0 : i32
    scf.if %2 {
      %cst_10 = arith.constant 0.000000e+00 : f32
      %12 = vector.broadcast %cst_10 : f32 to vector<256x128xf32>
      %c0_11 = arith.constant 0 : index
      %c0_12 = arith.constant 0 : index
      %13 = vector.load %arg8[%c0_11, %c0_12] : memref<256x128xf32, #tpu.memory_space<vmem>>, vector<256x128xf32>
      tpu.vector_store %arg8[%c0_11, %c0_12], %12 {strides = array<i32>} : memref<256x128xf32, #tpu.memory_space<vmem>>, vector<256x128xf32>,
    } else {
    }
    %c0 = arith.constant 0 : index
    %c0_1 = arith.constant 0 : index
    %3 = vector.load %arg8[%c0, %c0_1] : memref<256x128xf32, #tpu.memory_space<vmem>>, vector<256x128xf32>
    %c0_2 = arith.constant 0 : index
    %c0_3 = arith.constant 0 : index
    %4 = vector.load %arg3[%c0_2, %c0_3] : memref<256x128xbf16, #tpu.memory_space<vmem>>, vector<256x128xbf16>
    %c0_4 = arith.constant 0 : index
    %c0_5 = arith.constant 0 : index
    %5 = vector.load %arg4[%c0_4, %c0_5] : memref<128x128xbf16, #tpu.memory_space<vmem>>, vector<128x128xbf16>
    %cst = arith.constant dense<0.000000e+00> : vector<256x128xf32>
    %6 = tpu.matmul %4, %5, %cst {dimension_numbers = #tpu.dot_dimension_numbers<[1], [0], [0], [1], [0, 0, 1, 1], [], []>} : vector<256x128xbf16>, vector<128x128xbf16>, vector<256x128xf32> -> vector<256x128xf32>
    %7 = arith.addf %3, %6 : vector<256x128xf32>
    %c0_6 = arith.constant 0 : index
    %c0_7 = arith.constant 0 : index
    %8 = vector.load %arg8[%c0_6, %c0_7] : memref<256x128xf32, #tpu.memory_space<vmem>>, vector<256x128xf32>
    tpu.vector_store %arg8[%c0_6, %c0_7], %7 {strides = array<i32>} : memref<256x128xf32, #tpu.memory_space<vmem>>, vector<256x128xf32>,
    %c0_i32_8 = arith.constant 0 : i32
    %9 = arith.cmpi eq, %arg2, %c0_i32_8 : i32
    %10 = arith.extui %9 : i1 to i32
    %c0_i32_9 = arith.constant 0 : i32
    %11 = arith.cmpi ne, %10, %c0_i32_9 : i32
    scf.if %11 {
      %c0_10 = arith.constant 0 : index
      %c0_11 = arith.constant 0 : index
      %12 = vector.load %arg8[%c0_10, %c0_11] : memref<256x128xf32, #tpu.memory_space<vmem>>, vector<256x128xf32>
      %c0_12 = arith.constant 0 : index
      %c0_13 = arith.constant 0 : index
      %13 = vector.load %arg5[%c0_12, %c0_13] : memref<1x128xf32, #tpu.memory_space<vmem>>, vector<1x128xf32>
      %14 = vector.broadcast %13 : vector<1x128xf32> to vector<256x128xf32>
      %15 = arith.mulf %12, %14 : vector<256x128xf32>
      %c0_14 = arith.constant 0 : index
      %c0_15 = arith.constant 0 : index
      %16 = vector.load %arg6[%c0_14, %c0_15] : memref<1x128xf32, #tpu.memory_space<vmem>>, vector<1x128xf32>
      %17 = vector.broadcast %16 : vector<1x128xf32> to vector<256x128xf32>
      %18 = arith.addf %15, %17 : vector<256x128xf32>
      %cst_16 = arith.constant 0.000000e+00 : f32
      %19 = vector.broadcast %cst_16 : f32 to vector<256x128xf32>
      %20 = arith.maximumf %18, %19 : vector<256x128xf32>
      %21 = arith.truncf %20 : vector<256x128xf32> to vector<256x128xbf16>
      %c0_17 = arith.constant 0 : index
      %c0_18 = arith.constant 0 : index
      %22 = vector.load %arg7[%c0_17, %c0_18] : memref<256x128xbf16, #tpu.memory_space<vmem>>, vector<256x128xbf16>
      tpu.vector_store %arg7[%c0_17, %c0_18], %21 {strides = array<i32>} : memref<256x128xbf16, #tpu.memory_space<vmem>>, vector<256x128xbf16>,
    } else {
    }
    return
  }
  func.func @transform_0(%arg0: i32, %arg1: i32, %arg2: i32) -> (i32, i32) {
    %c0_i32 = arith.constant 0 : i32
    return %arg0, %arg2 : i32, i32
  }
  func.func @transform_1(%arg0: i32, %arg1: i32, %arg2: i32) -> (i32, i32) {
    %c0_i32 = arith.constant 0 : i32
    return %arg2, %arg1 : i32, i32
  }
  func.func @transform_2(%arg0: i32, %arg1: i32, %arg2: i32) -> (i32, i32) {
    %c0_i32 = arith.constant 0 : i32
    %c0_i32_0 = arith.constant 0 : i32
    return %c0_i32, %arg1 : i32, i32
  }
  func.func @transform_3(%arg0: i32, %arg1: i32, %arg2: i32) -> (i32, i32) {
    %c0_i32 = arith.constant 0 : i32
    %c0_i32_0 = arith.constant 0 : i32
    return %c0_i32, %arg1 : i32, i32
  }
  func.func @transform_4(%arg0: i32, %arg1: i32, %arg2: i32) -> (i32, i32) {
    %c0_i32 = arith.constant 0 : i32
    return %arg0, %arg1 : i32, i32
  }
}

</mosaic_0001>

<llo_original>
// kernel: tpu_custom_call.1
$region0: #{tpu_custom_call.1}
  #allocation0 [shape = 'u32[]', space=smem, size = 0x4, offset = 0x4, fixed_abs, tag = 'smem constant byte address 0x4 - core index']
  #allocation1 [shape = 'u32[72,128]{1,0:T(1,128)}', space=vmem, size = 0x9000, scoped, tag = 'internal scratch']
  #allocation2 [shape = 'f32[256,128]{1,0:T(8,128)}', space=vmem, size = 0x20000, scoped, tag = 'scratch operand']
  %s0 = inlined_call_operand.hbm [shape: bf16[10240,128], index: 0, kind: input, shape index: {}]
  %s1 = inlined_call_operand.hbm [shape: bf16[128,128], index: 1, kind: input, shape index: {}]
  %s2 = inlined_call_operand.hbm [shape: f32[1,128], index: 2, kind: input, shape index: {}]
  %s3 = inlined_call_operand.hbm [shape: f32[1,128], index: 3, kind: input, shape index: {}]
  %s4 = inlined_call_operand.hbm [shape: bf16[10240,128], index: 4, kind: output, shape index: {}]
  %s5 = sld [smem:[#allocation0]]
  $region73: #{tpu_custom_call.1} parent=0
    _
  %s7 = ssub.s32 1, %s5
  %s8 = scalar_select 0, %s7, %s5
  $region1: #{tpu_custom_call.1} parent=0
    #allocation3 [shape = 'u8[131072]{0}', space=vmem, size = 0x20000, scoped, tag = 'input window, operand 0']
    #allocation4 [shape = 's32[2]{0}', space=sflag, size = 0x8, scoped, tag = 'scoped memory for tpu_custom_call.1']
    #allocation5 [shape = 's32[2]{0}', space=sflag, size = 0x8, scoped, tag = 'scoped memory for tpu_custom_call.1']
    #allocation6 [shape = 'u8[32768]{0}', space=vmem, size = 0x8000, scoped, tag = 'input window, operand 1, single buffered']
    #allocation7 [shape = 's32[1]{0}', space=sflag, size = 0x4, scoped, tag = 'scoped memory for tpu_custom_call.1']
    #allocation8 [shape = 'u8[512]{0}', space=vmem, size = 0x400, scoped, tag = 'input window, operand 2, single buffered']
    #allocation9 [shape = 'u8[512]{0}', space=vmem, size = 0x400, scoped, tag = 'input window, operand 3, single buffered']
    #allocation10 [shape = 's32[1]{0}', space=sflag, size = 0x4, scoped, tag = 'scoped memory for tpu_custom_call.1']
    #allocation11 [shape = 'u8[131072]{0}', space=vmem, size = 0x20000, scoped, tag = 'output window, operand 0']
    %9 = vsyncpa [#allocation4], 0
    %s10 = scalar_lea.sflag [#allocation4], 1
    %11 = vsyncpa %s10, 0
    %12 = vsyncpa [#allocation7], 0
    %13 = vsyncpa [#allocation10], 0
    %14 = vsyncpa [#allocation5], 0
    %s15 = scalar_lea.sflag [#allocation5], 1
    %16 = vsyncpa %s15, 0
    loop: start=0, step=1, limit=42
    $region2: #{tpu_custom_call.1} parent=1 // loop_pre_header
      _
    $region3: #{tpu_custom_call.1} parent=1 // loop_header
      %s18 = sphi 0, %s22
      %p19 = scmp.ge.s32.totalorder %s18, 42
      %s25 = sphi 0, %s44
      %s26 = sphi 0, %s40
      %s27 = sphi 0, %s36
      %s28 = sphi 0, %s25
      %s29 = sphi 0, %s26
      %s30 = sphi 0, %s27
      %s31 = sphi 0, %s28
      %s32 = sphi 0, %s29
      %s33 = sphi 0, %s30
      %s49 = sphi 0, %s51
      %s52 = sphi 0, %s49
      %s53 = sphi 0, %s52
      %s69 = sphi 0, %s53
      %s77 = sphi 0, %s79
      %s80 = sphi 0, %s77
      %s81 = sphi 0, %s80
      %s97 = sphi 0, %s81
      %s103 = sphi 0, %s105
      %s106 = sphi 0, %s103
      %s107 = sphi 0, %s106
      %s123 = sphi 0, %s107
      %s129 = sphi 0, %s131
      %s132 = sphi 0, %s129
      %s133 = sphi 0, %s132
      %s149 = sphi 0, %s133
      %s157 = sphi 0, %s159
      %s160 = sphi 0, %s157
      %s161 = sphi 0, %s160
      %s177 = sphi 0, %s161
    $region4: #{tpu_custom_call.1} parent=1 // loop_header_branch
      %21 = sbr.rel (%p19) target = $region8
    $region5: #{tpu_custom_call.1} parent=1 // loop_body
      %s23 = ssub.s32 %s18, 1
      %s24 = ssub.s32 %s18, 2
      %s34 = sadd.s32 1, %s27
      %p35 = scmp.ge.s32.totalorder %s34, 1
      %s36 = scalar_select %p35, 0, %s34
      %s37 = sadd.s32 1, %s26
      %s38 = scalar_select %p35, %s37, %s26
      %p39 = scmp.ge.s32.totalorder %s38, 1
      %s40 = scalar_select %p39, 0, %s38
      %s41 = sadd.s32 1, %s25
      %s42 = scalar_select %p39, %s41, %s25
      %p43 = scmp.ge.s32.totalorder %s42, 40
      %s44 = scalar_select %p43, 0, %s42
      %s45 = ssub.s32 %s25, %s44
      %s46 = ssub.s32 %s27, %s36
      %s47 = sor.u32 %s45, %s46
      %p48 = scmp.eq.s32.totalorder %s47, 0
      %s50 = sadd.s32 %s49, 1
      %s51 = scalar_select %p48, %s49, %s50
      %p54 = pneg %p48
      %p55 = scmp.eq.s32.totalorder %s18, 39
      %p56 = por %p54, %p55
      %p57 = scmp.ne.s32.totalorder %s49, %s52
      %p58 = scmp.eq.s32.totalorder %s18, 0
      %p59 = por %p57, %p58
      %p60 = scmp.ne.s32.totalorder %s49, %s52
      %p61 = scmp.eq.s32.totalorder %s23, 39
      %p62 = por %p60, %p61
      %p63 = scmp.ne.s32.totalorder %s52, %s53
      %p64 = scmp.eq.s32.totalorder %s23, 0
      %p65 = por %p63, %p64
      %p66 = scmp.ne.s32.totalorder %s52, %s53
      %p67 = scmp.eq.s32.totalorder %s24, 39
      %p68 = por %p66, %p67
      %p70 = scmp.ne.s32.totalorder %s53, %s69
      %p71 = scmp.eq.s32.totalorder %s24, 0
      %p72 = por %p70, %p71
      %s73 = ssub.s32 %s27, %s36
      %s74 = ssub.s32 %s26, %s40
      %s75 = sor.u32 %s73, %s74
      %p76 = scmp.eq.s32.totalorder %s75, 0
      %s78 = sadd.s32 %s77, 1
      %s79 = scalar_select %p76, %s77, %s78
      %p82 = pneg %p76
      %p83 = scmp.eq.s32.totalorder %s18, 39
      %p84 = por %p82, %p83
      %p85 = scmp.ne.s32.totalorder %s77, %s80
      %p86 = scmp.eq.s32.totalorder %s18, 0
      %p87 = por %p85, %p86
      %p88 = scmp.ne.s32.totalorder %s77, %s80
      %p89 = scmp.eq.s32.totalorder %s23, 39
      %p90 = por %p88, %p89
      %p91 = scmp.ne.s32.totalorder %s80, %s81
      %p92 = scmp.eq.s32.totalorder %s23, 0
      %p93 = por %p91, %p92
      %p94 = scmp.ne.s32.totalorder %s80, %s81
      %p95 = scmp.eq.s32.totalorder %s24, 39
      %p96 = por %p94, %p95
      %p98 = scmp.ne.s32.totalorder %s81, %s97
      %p99 = scmp.eq.s32.totalorder %s24, 0
      %p100 = por %p98, %p99
      %s101 = ssub.s32 %s26, %s40
      %p102 = scmp.eq.s32.totalorder %s101, 0
      %s104 = sadd.s32 %s103, 1
      %s105 = scalar_select %p102, %s103, %s104
      %p108 = pneg %p102
      %p109 = scmp.eq.s32.totalorder %s18, 39
      %p110 = por %p108, %p109
      %p111 = scmp.ne.s32.totalorder %s103, %s106
      %p112 = scmp.eq.s32.totalorder %s18, 0
      %p113 = por %p111, %p112
      %p114 = scmp.ne.s32.totalorder %s103, %s106
      %p115 = scmp.eq.s32.totalorder %s23, 39
      %p116 = por %p114, %p115
      %p117 = scmp.ne.s32.totalorder %s106, %s107
      %p118 = scmp.eq.s32.totalorder %s23, 0
      %p119 = por %p117, %p118
      %p120 = scmp.ne.s32.totalorder %s106, %s107
      %p121 = scmp.eq.s32.totalorder %s24, 39
      %p122 = por %p120, %p121
      %p124 = scmp.ne.s32.totalorder %s107, %s123
      %p125 = scmp.eq.s32.totalorder %s24, 0
      %p126 = por %p124, %p125
      %s127 = ssub.s32 %s26, %s40
      %p128 = scmp.eq.s32.totalorder %s127, 0
      %s130 = sadd.s32 %s129, 1
      %s131 = scalar_select %p128, %s129, %s130
      %p134 = pneg %p128
      %p135 = scmp.eq.s32.totalorder %s18, 39
      %p136 = por %p134, %p135
      %p137 = scmp.ne.s32.totalorder %s129, %s132
      %p138 = scmp.eq.s32.totalorder %s18, 0
      %p139 = por %p137, %p138
      %p140 = scmp.ne.s32.totalorder %s129, %s132
      %p141 = scmp.eq.s32.totalorder %s23, 39
      %p142 = por %p140, %p141
      %p143 = scmp.ne.s32.totalorder %s132, %s133
      %p144 = scmp.eq.s32.totalorder %s23, 0
      %p145 = por %p143, %p144
      %p146 = scmp.ne.s32.totalorder %s132, %s133
      %p147 = scmp.eq.s32.totalorder %s24, 39
      %p148 = por %p146, %p147
      %p150 = scmp.ne.s32.totalorder %s133, %s149
      %p151 = scmp.eq.s32.totalorder %s24, 0
      %p152 = por %p150, %p151
      %s153 = ssub.s32 %s25, %s44
      %s154 = ssub.s32 %s26, %s40
      %s155 = sor.u32 %s153, %s154
      %p156 = scmp.eq.s32.totalorder %s155, 0
      %s158 = sadd.s32 %s157, 1
      %s159 = scalar_select %p156, %s157, %s158
      %p162 = pneg %p156
      %p163 = scmp.eq.s32.totalorder %s18, 39
      %p164 = por %p162, %p163
      %p165 = scmp.ne.s32.totalorder %s157, %s160
      %p166 = scmp.eq.s32.totalorder %s18, 0
      %p167 = por %p165, %p166
      %p168 = scmp.ne.s32.totalorder %s157, %s160
      %p169 = scmp.eq.s32.totalorder %s23, 39
      %p170 = por %p168, %p169
      %p171 = scmp.ne.s32.totalorder %s160, %s161
      %p172 = scmp.eq.s32.totalorder %s23, 0
      %p173 = por %p171, %p172
      %p174 = scmp.ne.s32.totalorder %s160, %s161
      %p175 = scmp.eq.s32.totalorder %s24, 39
      %p176 = por %p174, %p175
      %p178 = scmp.ne.s32.totalorder %s161, %s177
      %p179 = scmp.eq.s32.totalorder %s24, 0
      %p180 = por %p178, %p179
      %p181 = scmp.le.s32.totalorder 1, %s18
      %p182 = scmp.lt.s32.totalorder %s18, 41
      %p183 = pnand %p181, %p182
      %p184 = pneg %p183
      // Predicated region
      $region9: #{tpu_custom_call.1} parent=5 // pred_check
        _
      $region10: #{tpu_custom_call.1} parent=5 // pred_check_branch
        %186 = sbr.rel (%p183) target = $region12
      $region11: #{tpu_custom_call.1} parent=5 // pred_region
        %s187 = ssub.s32 %s18, 1
        // Predicated region
        $region13: #{tpu_custom_call.1} parent=11 // pred_check
          %p188 = pneg %p93
        $region14: #{tpu_custom_call.1} parent=11 // pred_check_branch
          %190 = sbr.rel (%p188) target = $region16
        $region15: #{tpu_custom_call.1} parent=11 // pred_region
          %s191 = smul.u32 16, %s30
          %193 = vsyncadd [#allocation7], 0
          %s194 = sadd.s32 %s29, %s191
          %s195 = smul.addr %s194, 4
          %s196 = scalar_lea.hbm %s1, %s195
          %s197 = sshll.u32 %s196, 4
          %s198 = int_to_ptr.hbm [resolvable:$true] %s197
          %s199 = sshll.u32 [#allocation6], 4
          %s200 = int_to_ptr.vmem [resolvable:$true] %s199
          %205 = dma.hbm_to_vmem [thread:$0]  %s198, 1024, %s200, [#allocation7], 64, 64, 4
        $region16: #{tpu_custom_call.1} parent=11 // pred_fallthru
          _
        // Predicated region
        $region17: #{tpu_custom_call.1} parent=11 // pred_check
          %p206 = pneg %p119
        $region18: #{tpu_custom_call.1} parent=11 // pred_check_branch
          %208 = sbr.rel (%p206) target = $region20
        $region19: #{tpu_custom_call.1} parent=11 // pred_region
          %210 = vsyncadd [#allocation7], 0
          %s211 = scalar_lea.hbm %s2, %s29
          %s213 = sshll.u32 %s211, 4
          %s214 = int_to_ptr.hbm [resolvable:$true] %s213
          %s215 = sshll.u32 [#allocation8], 4
          %s216 = int_to_ptr.vmem [resolvable:$true] %s215
          %218 = dma.hbm_to_vmem [thread:$0]  %s214, 16, %s216, [#allocation7]
        $region20: #{tpu_custom_call.1} parent=11 // pred_fallthru
          _
        // Predicated region
        $region21: #{tpu_custom_call.1} parent=11 // pred_check
          %p219 = pneg %p145
        $region22: #{tpu_custom_call.1} parent=11 // pred_check_branch
          %221 = sbr.rel (%p219) target = $region24
        $region23: #{tpu_custom_call.1} parent=11 // pred_region
          %223 = vsyncadd [#allocation10], 0
          %s224 = scalar_lea.hbm %s3, %s29
          %s226 = sshll.u32 %s224, 4
          %s227 = int_to_ptr.hbm [resolvable:$true] %s226
          %s228 = sshll.u32 [#allocation9], 4
          %s229 = int_to_ptr.vmem [resolvable:$true] %s228
          %231 = dma.hbm_to_vmem [thread:$0]  %s227, 16, %s229, [#allocation10]
        $region24: #{tpu_custom_call.1} parent=11 // pred_fallthru
          _
      $region12: #{tpu_custom_call.1} parent=5 // pred_fallthru
        _
      %p232 = scmp.lt.s32.totalorder %s18, 40
      // Predicated region
      $region25: #{tpu_custom_call.1} parent=5 // pred_check
        %p233 = pneg %p232
      $region26: #{tpu_custom_call.1} parent=5 // pred_check_branch
        %235 = sbr.rel (%p233) target = $region28
      $region27: #{tpu_custom_call.1} parent=5 // pred_region
        // Predicated region
        $region29: #{tpu_custom_call.1} parent=27 // pred_check
          %p236 = pneg %p59
        $region30: #{tpu_custom_call.1} parent=27 // pred_check_branch
          %238 = sbr.rel (%p236) target = $region32
        $region31: #{tpu_custom_call.1} parent=27 // pred_region
          %s239 = sand.u32 %s49, 1
          %s240 = scalar_lea.sflag [#allocation4], %s239
          %s241 = sand.u32 %s49, 1
          %s242 = smul.addr %s241, 128
          %s243 = scalar_lea.vmem [#allocation3], %s242
          %s244 = smul.u32 32, %s25
          %246 = vsyncadd %s240, 0
          %s247 = sadd.s32 %s27, %s244
          %s248 = smul.addr %s247, 4
          %s249 = scalar_lea.hbm %s0, %s248
          %s250 = sshll.u32 %s249, 4
          %s251 = int_to_ptr.hbm [resolvable:$true] %s250
          %s252 = sshll.u32 %s243, 4
          %s253 = int_to_ptr.vmem [resolvable:$true] %s252
          %258 = dma.hbm_to_vmem [thread:$0]  %s251, 2048, %s253, %s240, 64, 64, 4
        $region32: #{tpu_custom_call.1} parent=27 // pred_fallthru
          _
      $region28: #{tpu_custom_call.1} parent=5 // pred_fallthru
        _
      %p259 = scmp.le.s32.totalorder 1, %s18
      %p260 = scmp.lt.s32.totalorder %s18, 41
      %p261 = pnand %p259, %p260
      %p262 = pneg %p261
      // Predicated region
      $region33: #{tpu_custom_call.1} parent=5 // pred_check
        _
      $region34: #{tpu_custom_call.1} parent=5 // pred_check_branch
        %264 = sbr.rel (%p261) target = $region36
      $region35: #{tpu_custom_call.1} parent=5 // pred_region
        %s265 = ssub.s32 %s18, 1
        %s266 = sand.u32 %s52, 1
        %s267 = scalar_lea.sflag [#allocation4], %s266
        %s268 = sand.u32 %s52, 1
        %s269 = smul.addr %s268, 128
        %s270 = scalar_lea.vmem [#allocation3], %s269
        // Predicated region
        $region37: #{tpu_custom_call.1} parent=35 // pred_check
          %p271 = pneg %p65
        $region38: #{tpu_custom_call.1} parent=35 // pred_check_branch
          %273 = sbr.rel (%p271) target = $region40
        $region39: #{tpu_custom_call.1} parent=35 // pred_region
          %275 = dma.done %s267, 2048
        $region40: #{tpu_custom_call.1} parent=35 // pred_fallthru
          _
        // Predicated region
        $region41: #{tpu_custom_call.1} parent=35 // pred_check
          %p276 = pneg %p93
        $region42: #{tpu_custom_call.1} parent=35 // pred_check_branch
          %278 = sbr.rel (%p276) target = $region44
        $region43: #{tpu_custom_call.1} parent=35 // pred_region
          %280 = dma.done [#allocation7], 1024
        $region44: #{tpu_custom_call.1} parent=35 // pred_fallthru
          _
        // Predicated region
        $region45: #{tpu_custom_call.1} parent=35 // pred_check
          %p281 = pneg %p119
        $region46: #{tpu_custom_call.1} parent=35 // pred_check_branch
          %283 = sbr.rel (%p281) target = $region48
        $region47: #{tpu_custom_call.1} parent=35 // pred_region
          %285 = dma.done [#allocation7], 16
        $region48: #{tpu_custom_call.1} parent=35 // pred_fallthru
          _
        // Predicated region
        $region49: #{tpu_custom_call.1} parent=35 // pred_check
          %p286 = pneg %p145
        $region50: #{tpu_custom_call.1} parent=35 // pred_check_branch
          %288 = sbr.rel (%p286) target = $region52
        $region51: #{tpu_custom_call.1} parent=35 // pred_region
          %290 = dma.done [#allocation10], 16
        $region52: #{tpu_custom_call.1} parent=35 // pred_fallthru
          _
        %s291 = sand.u32 %s52, 1
        %s292 = scalar_lea.sflag [#allocation4], %s291
        %s293 = sand.u32 %s52, 1
        %s294 = smul.addr %s293, 128
        %s295 = scalar_lea.vmem [#allocation3], %s294
        %p296 = pneg %p65
        %p297 = pneg %p62
        %p298 = pneg %p93
        %p299 = pneg %p90
        %p300 = pneg %p119
        %p301 = pneg %p116
        %p302 = pneg %p145
        %p303 = pneg %p142
        %p304 = pneg %p173
        %p305 = pneg %p170
        %s306 = sand.u32 %s160, 1
        %s307 = scalar_lea.sflag [#allocation5], %s306
        %s308 = sand.u32 %s160, 1
        %s309 = smul.addr %s308, 128
        %s310 = scalar_lea.vmem [#allocation11], %s309
        %s311 = smul.u32 32, %s28
        %s312 = smul.u32 16, %s30
        %s313 = smul.u32 32, %s28
        %p314 = scmp.eq.s32.totalorder %s30, 0
        // Predicated region
        $region53: #{tpu_custom_call.1} parent=35 // pred_check
          %p315 = pneg %p314
        $region54: #{tpu_custom_call.1} parent=35 // pred_check_branch
          %317 = sbr.rel (%p315) target = $region56
        $region55: #{tpu_custom_call.1} parent=35 // pred_region
          %318 = vst [vmem:[#allocation2] sm:$0xff] 0.0
          %319 = vst [vmem:[#allocation2 + $0x8] sm:$0xff] 0.0
          %320 = vst [vmem:[#allocation2 + $0x10] sm:$0xff] 0.0
          %321 = vst [vmem:[#allocation2 + $0x18] sm:$0xff] 0.0
          %322 = vst [vmem:[#allocation2 + $0x20] sm:$0xff] 0.0
          %323 = vst [vmem:[#allocation2 + $0x28] sm:$0xff] 0.0
          %324 = vst [vmem:[#allocation2 + $0x30] sm:$0xff] 0.0
          %325 = vst [vmem:[#allocation2 + $0x38] sm:$0xff] 0.0
          %326 = vst [vmem:[#allocation2 + $0x40] sm:$0xff] 0.0
          %327 = vst [vmem:[#allocation2 + $0x48] sm:$0xff] 0.0
          %328 = vst [vmem:[#allocation2 + $0x50] sm:$0xff] 0.0
          %329 = vst [vmem:[#allocation2 + $0x58] sm:$0xff] 0.0
          %330 = vst [vmem:[#allocation2 + $0x60] sm:$0xff] 0.0
          %331 = vst [vmem:[#allocation2 + $0x68] sm:$0xff] 0.0
          %332 = vst [vmem:[#allocation2 + $0x70] sm:$0xff] 0.0
          %333 = vst [vmem:[#allocation2 + $0x78] sm:$0xff] 0.0
          %334 = vst [vmem:[#allocation2 + $0x80] sm:$0xff] 0.0
          %335 = vst [vmem:[#allocation2 + $0x88] sm:$0xff] 0.0
          %336 = vst [vmem:[#allocation2 + $0x90] sm:$0xff] 0.0
          %337 = vst [vmem:[#allocation2 + $0x98] sm:$0xff] 0.0
          %338 = vst [vmem:[#allocation2 + $0xa0] sm:$0xff] 0.0
          %339 = vst [vmem:[#allocation2 + $0xa8] sm:$0xff] 0.0
          %340 = vst [vmem:[#allocation2 + $0xb0] sm:$0xff] 0.0
          %341 = vst [vmem:[#allocation2 + $0xb8] sm:$0xff] 0.0
          %342 = vst [vmem:[#allocation2 + $0xc0] sm:$0xff] 0.0
          %343 = vst [vmem:[#allocation2 + $0xc8] sm:$0xff] 0.0
          %344 = vst [vmem:[#allocation2 + $0xd0] sm:$0xff] 0.0
          %345 = vst [vmem:[#allocation2 + $0xd8] sm:$0xff] 0.0
          %346 = vst [vmem:[#allocation2 + $0xe0] sm:$0xff] 0.0
          %347 = vst [vmem:[#allocation2 + $0xe8] sm:$0xff] 0.0
          %348 = vst [vmem:[#allocation2 + $0xf0] sm:$0xff] 0.0
          %349 = vst [vmem:[#allocation2 + $0xf8] sm:$0xff] 0.0
        $region56: #{tpu_custom_call.1} parent=35 // pred_fallthru
          _
        %v350 = vld [vmem:[#allocation2] sm:$0xff]
        %v351 = vld [vmem:[#allocation2 + $0x8] sm:$0xff]
        %v352 = vld [vmem:[#allocation2 + $0x10] sm:$0xff]
        %v353 = vld [vmem:[#allocation2 + $0x18] sm:$0xff]
        %v354 = vld [vmem:[#allocation2 + $0x20] sm:$0xff]
        %v355 = vld [vmem:[#allocation2 + $0x28] sm:$0xff]
        %v356 = vld [vmem:[#allocation2 + $0x30] sm:$0xff]
        %v357 = vld [vmem:[#allocation2 + $0x38] sm:$0xff]
        %v358 = vld [vmem:[#allocation2 + $0x40] sm:$0xff]
        %v359 = vld [vmem:[#allocation2 + $0x48] sm:$0xff]
        %v360 = vld [vmem:[#allocation2 + $0x50] sm:$0xff]
        %v361 = vld [vmem:[#allocation2 + $0x58] sm:$0xff]
        %v362 = vld [vmem:[#allocation2 + $0x60] sm:$0xff]
        %v363 = vld [vmem:[#allocation2 + $0x68] sm:$0xff]
        %v364 = vld [vmem:[#allocation2 + $0x70] sm:$0xff]
        %v365 = vld [vmem:[#allocation2 + $0x78] sm:$0xff]
        %v366 = vld [vmem:[#allocation2 + $0x80] sm:$0xff]
        %v367 = vld [vmem:[#allocation2 + $0x88] sm:$0xff]
        %v368 = vld [vmem:[#allocation2 + $0x90] sm:$0xff]
        %v369 = vld [vmem:[#allocation2 + $0x98] sm:$0xff]
        %v370 = vld [vmem:[#allocation2 + $0xa0] sm:$0xff]
        %v371 = vld [vmem:[#allocation2 + $0xa8] sm:$0xff]
        %v372 = vld [vmem:[#allocation2 + $0xb0] sm:$0xff]
        %v373 = vld [vmem:[#allocation2 + $0xb8] sm:$0xff]
        %v374 = vld [vmem:[#allocation2 + $0xc0] sm:$0xff]
        %v375 = vld [vmem:[#allocation2 + $0xc8] sm:$0xff]
        %v376 = vld [vmem:[#allocation2 + $0xd0] sm:$0xff]
        %v377 = vld [vmem:[#allocation2 + $0xd8] sm:$0xff]
        %v378 = vld [vmem:[#allocation2 + $0xe0] sm:$0xff]
        %v379 = vld [vmem:[#allocation2 + $0xe8] sm:$0xff]
        %v380 = vld [vmem:[#allocation2 + $0xf0] sm:$0xff]
        %v381 = vld [vmem:[#allocation2 + $0xf8] sm:$0xff]
        %v382 = vld [vmem:[%s270] sm:$0xf]
        %v383 = vld [vmem:[%s270 + $0x4] sm:$0xf]
        %v384 = vld [vmem:[%s270 + $0x8] sm:$0xf]
        %v385 = vld [vmem:[%s270 + $0xc] sm:$0xf]
        %v386 = vld [vmem:[%s270 + $0x10] sm:$0xf]
        %v387 = vld [vmem:[%s270 + $0x14] sm:$0xf]
        %v388 = vld [vmem:[%s270 + $0x18] sm:$0xf]
        %v389 = vld [vmem:[%s270 + $0x1c] sm:$0xf]
        %v390 = vld [vmem:[%s270 + $0x20] sm:$0xf]
        %v391 = vld [vmem:[%s270 + $0x24] sm:$0xf]
        %v392 = vld [vmem:[%s270 + $0x28] sm:$0xf]
        %v393 = vld [vmem:[%s270 + $0x2c] sm:$0xf]
        %v394 = vld [vmem:[%s270 + $0x30] sm:$0xf]
        %v395 = vld [vmem:[%s270 + $0x34] sm:$0xf]
        %v396 = vld [vmem:[%s270 + $0x38] sm:$0xf]
        %v397 = vld [vmem:[%s270 + $0x3c] sm:$0xf]
        %v398 = vld [vmem:[%s270 + $0x40] sm:$0xf]
        %v399 = vld [vmem:[%s270 + $0x44] sm:$0xf]
        %v400 = vld [vmem:[%s270 + $0x48] sm:$0xf]
        %v401 = vld [vmem:[%s270 + $0x4c] sm:$0xf]
        %v402 = vld [vmem:[%s270 + $0x50] sm:$0xf]
        %v403 = vld [vmem:[%s270 + $0x54] sm:$0xf]
        %v404 = vld [vmem:[%s270 + $0x58] sm:$0xf]
        %v405 = vld [vmem:[%s270 + $0x5c] sm:$0xf]
        %v406 = vld [vmem:[%s270 + $0x60] sm:$0xf]
        %v407 = vld [vmem:[%s270 + $0x64] sm:$0xf]
        %v408 = vld [vmem:[%s270 + $0x68] sm:$0xf]
        %v409 = vld [vmem:[%s270 + $0x6c] sm:$0xf]
        %v410 = vld [vmem:[%s270 + $0x70] sm:$0xf]
        %v411 = vld [vmem:[%s270 + $0x74] sm:$0xf]
        %v412 = vld [vmem:[%s270 + $0x78] sm:$0xf]
        %v413 = vld [vmem:[%s270 + $0x7c] sm:$0xf]
        %v414 = vld [vmem:[#allocation6] sm:$0xf]
        %v415 = vld [vmem:[#allocation6 + $0x4] sm:$0xf]
        %v416 = vld [vmem:[#allocation6 + $0x8] sm:$0xf]
        %v417 = vld [vmem:[#allocation6 + $0xc] sm:$0xf]
        %v418 = vld [vmem:[#allocation6 + $0x10] sm:$0xf]
        %v419 = vld [vmem:[#allocation6 + $0x14] sm:$0xf]
        %v420 = vld [vmem:[#allocation6 + $0x18] sm:$0xf]
        %v421 = vld [vmem:[#allocation6 + $0x1c] sm:$0xf]
        %v422 = vld [vmem:[#allocation6 + $0x20] sm:$0xf]
        %v423 = vld [vmem:[#allocation6 + $0x24] sm:$0xf]
        %v424 = vld [vmem:[#allocation6 + $0x28] sm:$0xf]
        %v425 = vld [vmem:[#allocation6 + $0x2c] sm:$0xf]
        %v426 = vld [vmem:[#allocation6 + $0x30] sm:$0xf]
        %v427 = vld [vmem:[#allocation6 + $0x34] sm:$0xf]
        %v428 = vld [vmem:[#allocation6 + $0x38] sm:$0xf]
        %v429 = vld [vmem:[#allocation6 + $0x3c] sm:$0xf]
        %v462 = vunpack.c.l.b16 %v382
        %v463 = vunpack.c.l.b16 %v383
        %v464 = vunpack.c.l.b16 %v384
        %v465 = vunpack.c.l.b16 %v385
        %v466 = vunpack.c.l.b16 %v386
        %v467 = vunpack.c.l.b16 %v387
        %v468 = vunpack.c.l.b16 %v388
        %v469 = vunpack.c.l.b16 %v389
        %v470 = vunpack.c.l.b16 %v390
        %v471 = vunpack.c.l.b16 %v391
        %v472 = vunpack.c.l.b16 %v392
        %v473 = vunpack.c.l.b16 %v393
        %v474 = vunpack.c.l.b16 %v394
        %v475 = vunpack.c.l.b16 %v395
        %v476 = vunpack.c.l.b16 %v396
        %v477 = vunpack.c.l.b16 %v397
        %v478 = vunpack.c.l.b16 %v398
        %v479 = vunpack.c.l.b16 %v399
        %v480 = vunpack.c.l.b16 %v400
        %v481 = vunpack.c.l.b16 %v401
        %v482 = vunpack.c.l.b16 %v402
        %v483 = vunpack.c.l.b16 %v403
        %v484 = vunpack.c.l.b16 %v404
        %v485 = vunpack.c.l.b16 %v405
        %v486 = vunpack.c.l.b16 %v406
        %v487 = vunpack.c.l.b16 %v407
        %v488 = vunpack.c.l.b16 %v408
        %v489 = vunpack.c.l.b16 %v409
        %v490 = vunpack.c.l.b16 %v410
        %v491 = vunpack.c.l.b16 %v411
        %v492 = vunpack.c.l.b16 %v412
        %v493 = vunpack.c.l.b16 %v413
        %v494 = vpack.c.b16 %v463, %v462
        %v495 = vpack.c.b16 %v465, %v464
        %v496 = vpack.c.b16 %v467, %v466
        %v497 = vpack.c.b16 %v469, %v468
        %v498 = vpack.c.b16 %v471, %v470
        %v499 = vpack.c.b16 %v473, %v472
        %v500 = vpack.c.b16 %v475, %v474
        %v501 = vpack.c.b16 %v477, %v476
        %v502 = vpack.c.b16 %v479, %v478
        %v503 = vpack.c.b16 %v481, %v480
        %v504 = vpack.c.b16 %v483, %v482
        %v505 = vpack.c.b16 %v485, %v484
        %v506 = vpack.c.b16 %v487, %v486
        %v507 = vpack.c.b16 %v489, %v488
        %v508 = vpack.c.b16 %v491, %v490
        %v509 = vpack.c.b16 %v493, %v492
        %v542 = vunpack.c.l.b16 %v414
        %v543 = vunpack.c.l.b16 %v415
        %v544 = vunpack.c.l.b16 %v416
        %v545 = vunpack.c.l.b16 %v417
        %v546 = vunpack.c.l.b16 %v418
        %v547 = vunpack.c.l.b16 %v419
        %v548 = vunpack.c.l.b16 %v420
        %v549 = vunpack.c.l.b16 %v421
        %v550 = vunpack.c.l.b16 %v422
        %v551 = vunpack.c.l.b16 %v423
        %v552 = vunpack.c.l.b16 %v424
        %v553 = vunpack.c.l.b16 %v425
        %v554 = vunpack.c.l.b16 %v426
        %v555 = vunpack.c.l.b16 %v427
        %v556 = vunpack.c.l.b16 %v428
        %v557 = vunpack.c.l.b16 %v429
        %v558 = vpack.c.b16 %v543, %v542
        %v559 = vpack.c.b16 %v545, %v544
        %v560 = vpack.c.b16 %v547, %v546
        %v561 = vpack.c.b16 %v549, %v548
        %v562 = vpack.c.b16 %v551, %v550
        %v563 = vpack.c.b16 %v553, %v552
        %v564 = vpack.c.b16 %v555, %v554
        %v565 = vpack.c.b16 %v557, %v556
        %574 = vmatpush.bf16.msra.mxu0 %v565
        %575 = vmatpush.bf16.msra.mxu0 %v564
        %576 = vmatpush.bf16.msra.mxu0 %v563
        %577 = vmatpush.bf16.msra.mxu0 %v562
        %578 = vmatpush.bf16.msra.mxu0 %v561
        %579 = vmatpush.bf16.msra.mxu0 %v560
        %580 = vmatpush.bf16.msra.mxu0 %v559
        %581 = vmatpush.bf16.msra.mxu0 %v558
        %582 = vmatmul.bf16.gmra.mxu0 %v494
        %v583 = vpop.f32.mrf.mxu0
        %v584 = vadd.f32 0.0, %v583
        %v585 = vpop.f32.mrf.mxu0
        %v586 = vadd.f32 0.0, %v585
        %587 = vmatmul.bf16.gmra.mxu0 %v495
        %v588 = vpop.f32.mrf.mxu0
        %v589 = vadd.f32 0.0, %v588
        %v590 = vpop.f32.mrf.mxu0
        %v591 = vadd.f32 0.0, %v590
        %592 = vmatmul.bf16.gmra.mxu0 %v496
        %v593 = vpop.f32.mrf.mxu0
        %v594 = vadd.f32 0.0, %v593
        %v595 = vpop.f32.mrf.mxu0
        %v596 = vadd.f32 0.0, %v595
        %597 = vmatmul.bf16.gmra.mxu0 %v497
        %v598 = vpop.f32.mrf.mxu0
        %v599 = vadd.f32 0.0, %v598
        %v600 = vpop.f32.mrf.mxu0
        %v601 = vadd.f32 0.0, %v600
        %602 = vmatmul.bf16.gmra.mxu0 %v498
        %v603 = vpop.f32.mrf.mxu0
        %v604 = vadd.f32 0.0, %v603
        %v605 = vpop.f32.mrf.mxu0
        %v606 = vadd.f32 0.0, %v605
        %607 = vmatmul.bf16.gmra.mxu0 %v499
        %v608 = vpop.f32.mrf.mxu0
        %v609 = vadd.f32 0.0, %v608
        %v610 = vpop.f32.mrf.mxu0
        %v611 = vadd.f32 0.0, %v610
        %612 = vmatmul.bf16.gmra.mxu0 %v500
        %v613 = vpop.f32.mrf.mxu0
        %v614 = vadd.f32 0.0, %v613
        %v615 = vpop.f32.mrf.mxu0
        %v616 = vadd.f32 0.0, %v615
        %617 = vmatmul.bf16.gmra.mxu0 %v501
        %v618 = vpop.f32.mrf.mxu0
        %v619 = vadd.f32 0.0, %v618
        %v620 = vpop.f32.mrf.mxu0
        %v621 = vadd.f32 0.0, %v620
        %622 = vmatmul.bf16.gmra.mxu0 %v502
        %v623 = vpop.f32.mrf.mxu0
        %v624 = vadd.f32 0.0, %v623
        %v625 = vpop.f32.mrf.mxu0
        %v626 = vadd.f32 0.0, %v625
        %627 = vmatmul.bf16.gmra.mxu0 %v503
        %v628 = vpop.f32.mrf.mxu0
        %v629 = vadd.f32 0.0, %v628
        %v630 = vpop.f32.mrf.mxu0
        %v631 = vadd.f32 0.0, %v630
        %632 = vmatmul.bf16.gmra.mxu0 %v504
        %v633 = vpop.f32.mrf.mxu0
        %v634 = vadd.f32 0.0, %v633
        %v635 = vpop.f32.mrf.mxu0
        %v636 = vadd.f32 0.0, %v635
        %637 = vmatmul.bf16.gmra.mxu0 %v505
        %v638 = vpop.f32.mrf.mxu0
        %v639 = vadd.f32 0.0, %v638
        %v640 = vpop.f32.mrf.mxu0
        %v641 = vadd.f32 0.0, %v640
        %642 = vmatmul.bf16.gmra.mxu0 %v506
        %v643 = vpop.f32.mrf.mxu0
        %v644 = vadd.f32 0.0, %v643
        %v645 = vpop.f32.mrf.mxu0
        %v646 = vadd.f32 0.0, %v645
        %647 = vmatmul.bf16.gmra.mxu0 %v507
        %v648 = vpop.f32.mrf.mxu0
        %v649 = vadd.f32 0.0, %v648
        %v650 = vpop.f32.mrf.mxu0
        %v651 = vadd.f32 0.0, %v650
        %652 = vmatmul.bf16.gmra.mxu0 %v508
        %v653 = vpop.f32.mrf.mxu0
        %v654 = vadd.f32 0.0, %v653
        %v655 = vpop.f32.mrf.mxu0
        %v656 = vadd.f32 0.0, %v655
        %657 = vmatmul.bf16.gmra.mxu0 %v509
        %v658 = vpop.f32.mrf.mxu0
        %v659 = vadd.f32 0.0, %v658
        %v660 = vpop.f32.mrf.mxu0
        %v661 = vadd.f32 0.0, %v660
        %662 = vdwg.mxu0
        %v663 = vadd.f32 %v350, %v584
        %v664 = vadd.f32 %v351, %v586
        %v665 = vadd.f32 %v352, %v589
        %v666 = vadd.f32 %v353, %v591
        %v667 = vadd.f32 %v354, %v594
        %v668 = vadd.f32 %v355, %v596
        %v669 = vadd.f32 %v356, %v599
        %v670 = vadd.f32 %v357, %v601
        %v671 = vadd.f32 %v358, %v604
        %v672 = vadd.f32 %v359, %v606
        %v673 = vadd.f32 %v360, %v609
        %v674 = vadd.f32 %v361, %v611
        %v675 = vadd.f32 %v362, %v614
        %v676 = vadd.f32 %v363, %v616
        %v677 = vadd.f32 %v364, %v619
        %v678 = vadd.f32 %v365, %v621
        %v679 = vadd.f32 %v366, %v624
        %v680 = vadd.f32 %v367, %v626
        %v681 = vadd.f32 %v368, %v629
        %v682 = vadd.f32 %v369, %v631
        %v683 = vadd.f32 %v370, %v634
        %v684 = vadd.f32 %v371, %v636
        %v685 = vadd.f32 %v372, %v639
        %v686 = vadd.f32 %v373, %v641
        %v687 = vadd.f32 %v374, %v644
        %v688 = vadd.f32 %v375, %v646
        %v689 = vadd.f32 %v376, %v649
        %v690 = vadd.f32 %v377, %v651
        %v691 = vadd.f32 %v378, %v654
        %v692 = vadd.f32 %v379, %v656
        %v693 = vadd.f32 %v380, %v659
        %v694 = vadd.f32 %v381, %v661
        %695 = vst [vmem:[#allocation2] sm:$0xff] %v663
        %696 = vst [vmem:[#allocation2 + $0x8] sm:$0xff] %v664
        %697 = vst [vmem:[#allocation2 + $0x10] sm:$0xff] %v665
        %698 = vst [vmem:[#allocation2 + $0x18] sm:$0xff] %v666
        %699 = vst [vmem:[#allocation2 + $0x20] sm:$0xff] %v667
        %700 = vst [vmem:[#allocation2 + $0x28] sm:$0xff] %v668
        %701 = vst [vmem:[#allocation2 + $0x30] sm:$0xff] %v669
        %702 = vst [vmem:[#allocation2 + $0x38] sm:$0xff] %v670
        %703 = vst [vmem:[#allocation2 + $0x40] sm:$0xff] %v671
        %704 = vst [vmem:[#allocation2 + $0x48] sm:$0xff] %v672
        %705 = vst [vmem:[#allocation2 + $0x50] sm:$0xff] %v673
        %706 = vst [vmem:[#allocation2 + $0x58] sm:$0xff] %v674
        %707 = vst [vmem:[#allocation2 + $0x60] sm:$0xff] %v675
        %708 = vst [vmem:[#allocation2 + $0x68] sm:$0xff] %v676
        %709 = vst [vmem:[#allocation2 + $0x70] sm:$0xff] %v677
        %710 = vst [vmem:[#allocation2 + $0x78] sm:$0xff] %v678
        %711 = vst [vmem:[#allocation2 + $0x80] sm:$0xff] %v679
        %712 = vst [vmem:[#allocation2 + $0x88] sm:$0xff] %v680
        %713 = vst [vmem:[#allocation2 + $0x90] sm:$0xff] %v681
        %714 = vst [vmem:[#allocation2 + $0x98] sm:$0xff] %v682
        %715 = vst [vmem:[#allocation2 + $0xa0] sm:$0xff] %v683
        %716 = vst [vmem:[#allocation2 + $0xa8] sm:$0xff] %v684
        %717 = vst [vmem:[#allocation2 + $0xb0] sm:$0xff] %v685
        %718 = vst [vmem:[#allocation2 + $0xb8] sm:$0xff] %v686
        %719 = vst [vmem:[#allocation2 + $0xc0] sm:$0xff] %v687
        %720 = vst [vmem:[#allocation2 + $0xc8] sm:$0xff] %v688
        %721 = vst [vmem:[#allocation2 + $0xd0] sm:$0xff] %v689
        %722 = vst [vmem:[#allocation2 + $0xd8] sm:$0xff] %v690
        %723 = vst [vmem:[#allocation2 + $0xe0] sm:$0xff] %v691
        %724 = vst [vmem:[#allocation2 + $0xe8] sm:$0xff] %v692
        %725 = vst [vmem:[#allocation2 + $0xf0] sm:$0xff] %v693
        %726 = vst [vmem:[#allocation2 + $0xf8] sm:$0xff] %v694
        // Predicated region
        $region57: #{tpu_custom_call.1} parent=35 // pred_check
          %p727 = pneg %p314
        $region58: #{tpu_custom_call.1} parent=35 // pred_check_branch
          %729 = sbr.rel (%p727) target = $region60
        $region59: #{tpu_custom_call.1} parent=35 // pred_region
          %v730 = vld [vmem:[#allocation2] sm:$0xff]
          %v731 = vld [vmem:[#allocation2 + $0x8] sm:$0xff]
          %v732 = vld [vmem:[#allocation2 + $0x10] sm:$0xff]
          %v733 = vld [vmem:[#allocation2 + $0x18] sm:$0xff]
          %v734 = vld [vmem:[#allocation2 + $0x20] sm:$0xff]
          %v735 = vld [vmem:[#allocation2 + $0x28] sm:$0xff]
          %v736 = vld [vmem:[#allocation2 + $0x30] sm:$0xff]
          %v737 = vld [vmem:[#allocation2 + $0x38] sm:$0xff]
          %v738 = vld [vmem:[#allocation2 + $0x40] sm:$0xff]
          %v739 = vld [vmem:[#allocation2 + $0x48] sm:$0xff]
          %v740 = vld [vmem:[#allocation2 + $0x50] sm:$0xff]
          %v741 = vld [vmem:[#allocation2 + $0x58] sm:$0xff]
          %v742 = vld [vmem:[#allocation2 + $0x60] sm:$0xff]
          %v743 = vld [vmem:[#allocation2 + $0x68] sm:$0xff]
          %v744 = vld [vmem:[#allocation2 + $0x70] sm:$0xff]
          %v745 = vld [vmem:[#allocation2 + $0x78] sm:$0xff]
          %v746 = vld [vmem:[#allocation2 + $0x80] sm:$0xff]
          %v747 = vld [vmem:[#allocation2 + $0x88] sm:$0xff]
          %v748 = vld [vmem:[#allocation2 + $0x90] sm:$0xff]
          %v749 = vld [vmem:[#allocation2 + $0x98] sm:$0xff]
          %v750 = vld [vmem:[#allocation2 + $0xa0] sm:$0xff]
          %v751 = vld [vmem:[#allocation2 + $0xa8] sm:$0xff]
          %v752 = vld [vmem:[#allocation2 + $0xb0] sm:$0xff]
          %v753 = vld [vmem:[#allocation2 + $0xb8] sm:$0xff]
          %v754 = vld [vmem:[#allocation2 + $0xc0] sm:$0xff]
          %v755 = vld [vmem:[#allocation2 + $0xc8] sm:$0xff]
          %v756 = vld [vmem:[#allocation2 + $0xd0] sm:$0xff]
          %v757 = vld [vmem:[#allocation2 + $0xd8] sm:$0xff]
          %v758 = vld [vmem:[#allocation2 + $0xe0] sm:$0xff]
          %v759 = vld [vmem:[#allocation2 + $0xe8] sm:$0xff]
          %v760 = vld [vmem:[#allocation2 + $0xf0] sm:$0xff]
          %v761 = vld [vmem:[#allocation2 + $0xf8] sm:$0xff]
          %v762 = vld [vmem:[#allocation8] sm:$0x1]
          %v764 = vperm.slane %v762, 0
          %v766 = vmul.f32 %v730, %v764
          %v767 = vmul.f32 %v731, %v764
          %v768 = vmul.f32 %v732, %v764
          %v769 = vmul.f32 %v733, %v764
          %v770 = vmul.f32 %v734, %v764
          %v771 = vmul.f32 %v735, %v764
          %v772 = vmul.f32 %v736, %v764
          %v773 = vmul.f32 %v737, %v764
          %v774 = vmul.f32 %v738, %v764
          %v775 = vmul.f32 %v739, %v764
          %v776 = vmul.f32 %v740, %v764
          %v777 = vmul.f32 %v741, %v764
          %v778 = vmul.f32 %v742, %v764
          %v779 = vmul.f32 %v743, %v764
          %v780 = vmul.f32 %v744, %v764
          %v781 = vmul.f32 %v745, %v764
          %v782 = vmul.f32 %v746, %v764
          %v783 = vmul.f32 %v747, %v764
          %v784 = vmul.f32 %v748, %v764
          %v785 = vmul.f32 %v749, %v764
          %v786 = vmul.f32 %v750, %v764
          %v787 = vmul.f32 %v751, %v764
          %v788 = vmul.f32 %v752, %v764
          %v789 = vmul.f32 %v753, %v764
          %v790 = vmul.f32 %v754, %v764
          %v791 = vmul.f32 %v755, %v764
          %v792 = vmul.f32 %v756, %v764
          %v793 = vmul.f32 %v757, %v764
          %v794 = vmul.f32 %v758, %v764
          %v795 = vmul.f32 %v759, %v764
          %v796 = vmul.f32 %v760, %v764
          %v797 = vmul.f32 %v761, %v764
          %v798 = vld [vmem:[#allocation9] sm:$0x1]
          %v800 = vperm.slane %v798, 0
          %v802 = vadd.f32 %v766, %v800
          %v803 = vadd.f32 %v767, %v800
          %v804 = vadd.f32 %v768, %v800
          %v805 = vadd.f32 %v769, %v800
          %v806 = vadd.f32 %v770, %v800
          %v807 = vadd.f32 %v771, %v800
          %v808 = vadd.f32 %v772, %v800
          %v809 = vadd.f32 %v773, %v800
          %v810 = vadd.f32 %v774, %v800
          %v811 = vadd.f32 %v775, %v800
          %v812 = vadd.f32 %v776, %v800
          %v813 = vadd.f32 %v777, %v800
          %v814 = vadd.f32 %v778, %v800
          %v815 = vadd.f32 %v779, %v800
          %v816 = vadd.f32 %v780, %v800
          %v817 = vadd.f32 %v781, %v800
          %v818 = vadd.f32 %v782, %v800
          %v819 = vadd.f32 %v783, %v800
          %v820 = vadd.f32 %v784, %v800
          %v821 = vadd.f32 %v785, %v800
          %v822 = vadd.f32 %v786, %v800
          %v823 = vadd.f32 %v787, %v800
          %v824 = vadd.f32 %v788, %v800
          %v825 = vadd.f32 %v789, %v800
          %v826 = vadd.f32 %v790, %v800
          %v827 = vadd.f32 %v791, %v800
          %v828 = vadd.f32 %v792, %v800
          %v829 = vadd.f32 %v793, %v800
          %v830 = vadd.f32 %v794, %v800
          %v831 = vadd.f32 %v795, %v800
          %v832 = vadd.f32 %v796, %v800
          %v833 = vadd.f32 %v797, %v800
          %v834 = vmax.f32 %v802, 0.0
          %v835 = vmax.f32 %v803, 0.0
          %v836 = vmax.f32 %v804, 0.0
          %v837 = vmax.f32 %v805, 0.0
          %v838 = vmax.f32 %v806, 0.0
          %v839 = vmax.f32 %v807, 0.0
          %v840 = vmax.f32 %v808, 0.0
          %v841 = vmax.f32 %v809, 0.0
          %v842 = vmax.f32 %v810, 0.0
          %v843 = vmax.f32 %v811, 0.0
          %v844 = vmax.f32 %v812, 0.0
          %v845 = vmax.f32 %v813, 0.0
          %v846 = vmax.f32 %v814, 0.0
          %v847 = vmax.f32 %v815, 0.0
          %v848 = vmax.f32 %v816, 0.0
          %v849 = vmax.f32 %v817, 0.0
          %v850 = vmax.f32 %v818, 0.0
          %v851 = vmax.f32 %v819, 0.0
          %v852 = vmax.f32 %v820, 0.0
          %v853 = vmax.f32 %v821, 0.0
          %v854 = vmax.f32 %v822, 0.0
          %v855 = vmax.f32 %v823, 0.0
          %v856 = vmax.f32 %v824, 0.0
          %v857 = vmax.f32 %v825, 0.0
          %v858 = vmax.f32 %v826, 0.0
          %v859 = vmax.f32 %v827, 0.0
          %v860 = vmax.f32 %v828, 0.0
          %v861 = vmax.f32 %v829, 0.0
          %v862 = vmax.f32 %v830, 0.0
          %v863 = vmax.f32 %v831, 0.0
          %v864 = vmax.f32 %v832, 0.0
          %v865 = vmax.f32 %v833, 0.0
          %v866 = vpack.c.bf16 %v834, %v834
          %v867 = vpack.c.bf16 %v835, %v835
          %v868 = vpack.c.bf16 %v836, %v836
          %v869 = vpack.c.bf16 %v837, %v837
          %v870 = vpack.c.bf16 %v838, %v838
          %v871 = vpack.c.bf16 %v839, %v839
          %v872 = vpack.c.bf16 %v840, %v840
          %v873 = vpack.c.bf16 %v841, %v841
          %v874 = vpack.c.bf16 %v842, %v842
          %v875 = vpack.c.bf16 %v843, %v843
          %v876 = vpack.c.bf16 %v844, %v844
          %v877 = vpack.c.bf16 %v845, %v845
          %v878 = vpack.c.bf16 %v846, %v846
          %v879 = vpack.c.bf16 %v847, %v847
          %v880 = vpack.c.bf16 %v848, %v848
          %v881 = vpack.c.bf16 %v849, %v849
          %v882 = vpack.c.bf16 %v850, %v850
          %v883 = vpack.c.bf16 %v851, %v851
          %v884 = vpack.c.bf16 %v852, %v852
          %v885 = vpack.c.bf16 %v853, %v853
          %v886 = vpack.c.bf16 %v854, %v854
          %v887 = vpack.c.bf16 %v855, %v855
          %v888 = vpack.c.bf16 %v856, %v856
          %v889 = vpack.c.bf16 %v857, %v857
          %v890 = vpack.c.bf16 %v858, %v858
          %v891 = vpack.c.bf16 %v859, %v859
          %v892 = vpack.c.bf16 %v860, %v860
          %v893 = vpack.c.bf16 %v861, %v861
          %v894 = vpack.c.bf16 %v862, %v862
          %v895 = vpack.c.bf16 %v863, %v863
          %v896 = vpack.c.bf16 %v864, %v864
          %v897 = vpack.c.bf16 %v865, %v865
          %898 = vst [vmem:[%s310] sm:$0xf] %v866
          %899 = vst [vmem:[%s310 + $0x4] sm:$0xf] %v867
          %900 = vst [vmem:[%s310 + $0x8] sm:$0xf] %v868
          %901 = vst [vmem:[%s310 + $0xc] sm:$0xf] %v869
          %902 = vst [vmem:[%s310 + $0x10] sm:$0xf] %v870
          %903 = vst [vmem:[%s310 + $0x14] sm:$0xf] %v871
          %904 = vst [vmem:[%s310 + $0x18] sm:$0xf] %v872
          %905 = vst [vmem:[%s310 + $0x1c] sm:$0xf] %v873
          %906 = vst [vmem:[%s310 + $0x20] sm:$0xf] %v874
          %907 = vst [vmem:[%s310 + $0x24] sm:$0xf] %v875
          %908 = vst [vmem:[%s310 + $0x28] sm:$0xf] %v876
          %909 = vst [vmem:[%s310 + $0x2c] sm:$0xf] %v877
          %910 = vst [vmem:[%s310 + $0x30] sm:$0xf] %v878
          %911 = vst [vmem:[%s310 + $0x34] sm:$0xf] %v879
          %912 = vst [vmem:[%s310 + $0x38] sm:$0xf] %v880
          %913 = vst [vmem:[%s310 + $0x3c] sm:$0xf] %v881
          %914 = vst [vmem:[%s310 + $0x40] sm:$0xf] %v882
          %915 = vst [vmem:[%s310 + $0x44] sm:$0xf] %v883
          %916 = vst [vmem:[%s310 + $0x48] sm:$0xf] %v884
          %917 = vst [vmem:[%s310 + $0x4c] sm:$0xf] %v885
          %918 = vst [vmem:[%s310 + $0x50] sm:$0xf] %v886
          %919 = vst [vmem:[%s310 + $0x54] sm:$0xf] %v887
          %920 = vst [vmem:[%s310 + $0x58] sm:$0xf] %v888
          %921 = vst [vmem:[%s310 + $0x5c] sm:$0xf] %v889
          %922 = vst [vmem:[%s310 + $0x60] sm:$0xf] %v890
          %923 = vst [vmem:[%s310 + $0x64] sm:$0xf] %v891
          %924 = vst [vmem:[%s310 + $0x68] sm:$0xf] %v892
          %925 = vst [vmem:[%s310 + $0x6c] sm:$0xf] %v893
          %926 = vst [vmem:[%s310 + $0x70] sm:$0xf] %v894
          %927 = vst [vmem:[%s310 + $0x74] sm:$0xf] %v895
          %928 = vst [vmem:[%s310 + $0x78] sm:$0xf] %v896
          %929 = vst [vmem:[%s310 + $0x7c] sm:$0xf] %v897
        $region60: #{tpu_custom_call.1} parent=35 // pred_fallthru
          _
        %s930 = sand.u32 %s160, 1
        %s931 = scalar_lea.sflag [#allocation5], %s930
        %s932 = sand.u32 %s160, 1
        %s933 = smul.addr %s932, 128
        %s934 = scalar_lea.vmem [#allocation11], %s933
        // Predicated region
        $region61: #{tpu_custom_call.1} parent=35 // pred_check
          %p935 = pneg %p170
        $region62: #{tpu_custom_call.1} parent=35 // pred_check_branch
          %937 = sbr.rel (%p935) target = $region64
        $region63: #{tpu_custom_call.1} parent=35 // pred_region
          %s938 = smul.u32 32, %s28
          %940 = vsyncadd %s931, 0
          %s941 = sadd.s32 %s29, %s938
          %s942 = smul.addr %s941, 4
          %s943 = scalar_lea.hbm %s4, %s942
          %s944 = sshll.u32 %s934, 4
          %s945 = int_to_ptr.vmem [resolvable:$true] %s944
          %s946 = sshll.u32 %s943, 4
          %s947 = int_to_ptr.hbm [resolvable:$true] %s946
          %952 = dma.vmem_to_hbm [thread:$0]  %s945, 2048, %s947, %s931, 64, 64, 4
        $region64: #{tpu_custom_call.1} parent=35 // pred_fallthru
          _
      $region36: #{tpu_custom_call.1} parent=5 // pred_fallthru
        _
      %p953 = scmp.le.s32.totalorder 2, %s18
      // Predicated region
      $region65: #{tpu_custom_call.1} parent=5 // pred_check
        %p954 = pneg %p953
      $region66: #{tpu_custom_call.1} parent=5 // pred_check_branch
        %956 = sbr.rel (%p954) target = $region68
      $region67: #{tpu_custom_call.1} parent=5 // pred_region
        %s957 = ssub.s32 %s18, 2
        // Predicated region
        $region69: #{tpu_custom_call.1} parent=67 // pred_check
          %p958 = pneg %p176
        $region70: #{tpu_custom_call.1} parent=67 // pred_check_branch
          %960 = sbr.rel (%p958) target = $region72
        $region71: #{tpu_custom_call.1} parent=67 // pred_region
          %s961 = sand.u32 %s161, 1
          %s962 = scalar_lea.sflag [#allocation5], %s961
          %s963 = sand.u32 %s161, 1
          %s964 = smul.addr %s963, 128
          %s965 = scalar_lea.vmem [#allocation11], %s964
          %967 = dma.done %s962, 2048
        $region72: #{tpu_custom_call.1} parent=67 // pred_fallthru
          _
      $region68: #{tpu_custom_call.1} parent=5 // pred_fallthru
        _
    $region6: #{tpu_custom_call.1} parent=1 // loop_footer
      %s22 = sadd.s32 1, %s18
    $region7: #{tpu_custom_call.1} parent=1 // loop_footer_branch
      %17 = sbr.rel target = $region3
    $region8: #{tpu_custom_call.1} parent=1 // loop_exit
      _
    %968 = vsyncpa [#allocation4], 1
    %s969 = scalar_lea.sflag [#allocation4], 1
    %970 = vsyncpa %s969, 1
    %971 = vsyncpa [#allocation7], 1
    %972 = vsyncpa [#allocation10], 1
    %973 = vsyncpa [#allocation5], 1
    %s974 = scalar_lea.sflag [#allocation5], 1
    %975 = vsyncpa %s974, 1

</llo_original>
